<compile_context>
chip_gen: v7x
topology: tpu7x:2x2x1
jax: 0.10.0
libtpu: 0.0.40
codegen_flags: <defaults>
</compile_context>

<pallas_src>
import jax
import jax.numpy as jnp
from jax.experimental import pallas as pl
from jax.experimental.pallas import tpu as pltpu


# --------------------------------------------------------------------------
# Helpers
# --------------------------------------------------------------------------
def _round_up(x, m):
    return (x + m - 1) // m * m


def _tpu_vmem_capacity_bytes():
    """Generation-aware VMEM capacity (128 MiB on v5e/v6e, 64 MiB/TC on v7x)."""
    try:
        return int(pltpu.get_tpu_info().vmem_capacity_bytes)
    except Exception:
        return 64 * 1024 * 1024  # conservative default (v7x per-TensorCore)


def _largest_divisor_tile(B, per_unit_bytes, budget_bytes):
    """Largest divisor of B whose combined live bytes stay within budget."""
    bt = 1
    for cand in range(1, B + 1):
        if B % cand == 0 and cand * per_unit_bytes <= budget_bytes:
            bt = cand
    return bt


def _pick_spatial_tile(C, n128, itemsize, per_buffer_budget):
    """Largest multiple of 128 that divides n128 (no extra padding) while one
    (C, tn) buffer stays within the per-buffer budget."""
    tn_cap = (per_buffer_budget // max(1, C * itemsize)) // 128 * 128
    tn_cap = max(128, min(tn_cap, n128, 8192))
    m = n128 // 128
    best = 128
    for d in range(1, m + 1):
        if m % d == 0 and d * 128 <= tn_cap:
            best = d * 128
    return best


def _pick_softmax_row_block(C):
    """Row block for the in-place softmax epilogue (bounds VMEM temporaries)."""
    if C <= 1024:
        return C
    for rb in (512, 256, 128, 64, 32, 16, 8):
        if C % rb == 0:
            return rb
    return C


# --------------------------------------------------------------------------
# Fused single-pass kernel: per-batch slab resident in VMEM
# --------------------------------------------------------------------------
def _cam_fused_kernel(gamma_ref, x_ref, o_ref):
    x = x_ref[...]                                       # (bt, C, Np), native dtype
    # Channel Gram ("energy"): MXU in native dtype, f32 accumulation.
    energy = jnp.einsum('bcn,bdn->bcd', x, x,
                        preferred_element_type=jnp.float32)
    # softmax(rowmax(E) - E) == exp(rowmin(E) - E) / sum(...): a single
    # stabilizing subtraction; EUP approx reciprocal + one Newton step.
    e_min = jnp.min(energy, axis=-1, keepdims=True)
    p = jnp.exp(e_min - energy)
    s = jnp.sum(p, axis=-1, keepdims=True)
    inv = pl.reciprocal(s, approx=True)
    inv = inv * (2.0 - s * inv)
    attn = (p * inv).astype(x.dtype)                     # bf16 MXU operands when x is bf16
    out = jnp.einsum('bcd,bdn->bcn', attn, x,
                     preferred_element_type=jnp.float32)
    gamma = gamma_ref[0]
    o_ref[...] = (gamma * out + x.astype(jnp.float32)).astype(o_ref.dtype)


# --------------------------------------------------------------------------
# Two-pass fallback kernels (large slabs)
# --------------------------------------------------------------------------
def _make_energy_softmax_kernel(use_scratch, rows_per_block, C):
    """Accumulate E = x @ x^T over spatial tiles (into the output block when it
    is f32, else into an f32 scratch), then softmax in place, row-blocked."""

    def kernel(x_ref, attn_ref, *scratch):
        acc_ref = scratch[0] if use_scratch else attn_ref
        k = pl.program_id(1)

        @pl.when(k == 0)
        def _():
            acc_ref[...] = jnp.zeros_like(acc_ref)

        x = x_ref[...]                                   # (bt, C, tn), native dtype
        acc_ref[...] += jnp.einsum('bcn,bdn->bcd', x, x,
                                   preferred_element_type=jnp.float32)

        @pl.when(k == pl.num_programs(1) - 1)
        def _():
            def softmax_rows(rows):
                energy = acc_ref[:, rows, :]
                e_min = jnp.min(energy, axis=-1, keepdims=True)
                p = jnp.exp(e_min - energy)
                s = jnp.sum(p, axis=-1, keepdims=True)
                inv = pl.reciprocal(s, approx=True)
                inv = inv * (2.0 - s * inv)
                attn_ref[:, rows, :] = (p * inv).astype(attn_ref.dtype)

            if rows_per_block >= C:
                softmax_rows(slice(None))
            else:
                def body(i, carry):
                    start = pl.multiple_of(i * rows_per_block, rows_per_block)
                    softmax_rows(pl.ds(start, rows_per_block))
                    return carry
                jax.lax.fori_loop(0, C // rows_per_block, body, 0)

    return kernel


def _apply_attention_kernel(gamma_ref, attn_ref, x_ref, o_ref):
    """out = gamma * (attention @ x) + x on a (bt, C, tn) spatial tile."""
    x = x_ref[...]
    attn = attn_ref[...]
    if attn.dtype != x.dtype:                            # never taken: attn stored in x.dtype
        attn = attn.astype(x.dtype)
    out = jnp.einsum('bcd,bdn->bcn', attn, x,
                     preferred_element_type=jnp.float32)
    gamma = gamma_ref[0]
    o_ref[...] = (gamma * out + x.astype(jnp.float32)).astype(o_ref.dtype)


def _cam_two_pass(x_flat, gamma, B, C, Np, itemsize, cap):
    # Generation-aware per-buffer budget: ~2 MiB on 64 MiB chips (v7x),
    # ~6 MiB on 128 MiB chips (v5e/v6e) -> larger tn, fewer grid steps.
    per_buffer_budget = (2 * 1024 * 1024 if cap <= 64 * 1024 * 1024
                         else 6 * 1024 * 1024)
    tn = _pick_spatial_tile(C, Np, itemsize, per_buffer_budget)
    nk = Np // tn

    attn_dtype = x_flat.dtype                            # attention stored in x.dtype
    attn_isize = jnp.dtype(attn_dtype).itemsize
    use_scratch = jnp.dtype(attn_dtype) != jnp.dtype(jnp.float32)
    rows_per_block = _pick_softmax_row_block(C)

    # ---- Pass 1: energy accumulation over N tiles + in-place softmax -------
    per_batch_live1 = (2 * C * tn * itemsize             # x tiles (double buffered)
                       + C * C * attn_isize              # attention out (single buffered)
                       + (C * C * 4 if use_scratch else 0)
                       + 2 * rows_per_block * C * 4)     # softmax temporaries
    bt = _largest_divisor_tile(B, per_batch_live1, int(0.5 * cap))
    vmem1 = int(min(cap, max(2 * bt * per_batch_live1, 32 * 1024 * 1024)))

    attention = pl.pallas_call(
        _make_energy_softmax_kernel(use_scratch, rows_per_block, C),
        out_shape=jax.ShapeDtypeStruct((B, C, C), attn_dtype),
        grid=(B // bt, nk),
        in_specs=[pl.BlockSpec((bt, C, tn), lambda b, k: (b, 0, k))],
        # Block index constant over k -> resident accumulator; single-buffered
        # to halve the attention VMEM footprint (matters on v7x's 64 MiB).
        out_specs=pl.BlockSpec((bt, C, C), lambda b, k: (b, 0, 0),
                               pipeline_mode=pl.Buffered(1)),
        scratch_shapes=([pltpu.VMEM((bt, C, C), jnp.float32)]
                        if use_scratch else []),
        compiler_params=pltpu.CompilerParams(
            dimension_semantics=("parallel", "arbitrary"),
            vmem_limit_bytes=vmem1),
        cost_estimate=pl.CostEstimate(
            flops=2 * B * C * C * Np,
            transcendentals=B * C * C,
            bytes_accessed=B * C * Np * itemsize + B * C * C * attn_isize),
    )(x_flat)
    # TODO(synk): on v7x with B == 1 and an MXU-bound Gram (bf16, large C),
    # expose a second parallel axis over C row-blocks so both TensorCores work
    # on pass 1 (costs ~1.5x x-traffic; only worth it when compute-bound).

    # ---- Pass 2: out = gamma * (attention @ x) + x, tiled over N ------------
    per_batch_live2 = (C * C * attn_isize                # attention (single buffered)
                       + 2 * C * tn * itemsize           # x tiles
                       + 2 * C * tn * itemsize           # out tiles
                       + C * tn * 4)                     # f32 matmul temporary
    bt2 = _largest_divisor_tile(B, per_batch_live2, int(0.5 * cap))
    vmem2 = int(min(cap, max(2 * bt2 * per_batch_live2, 32 * 1024 * 1024)))

    out_flat = pl.pallas_call(
        _apply_attention_kernel,
        out_shape=jax.ShapeDtypeStruct((B, C, Np), x_flat.dtype),
        grid=(B // bt2, nk),
        in_specs=[
            pl.BlockSpec(memory_space=pltpu.MemorySpace.SMEM),        # gamma
            pl.BlockSpec((bt2, C, C), lambda b, k: (b, 0, 0),
                         pipeline_mode=pl.Buffered(1)),               # attention
            pl.BlockSpec((bt2, C, tn), lambda b, k: (b, 0, k)),       # x tile
        ],
        out_specs=pl.BlockSpec((bt2, C, tn), lambda b, k: (b, 0, k)),
        compiler_params=pltpu.CompilerParams(
            # Both axes independent -> shards across both v7x TensorCores even
            # when B == 1 (no effect on single-TC v5e/v6e).
            dimension_semantics=("parallel", "parallel"),
            vmem_limit_bytes=vmem2),
        cost_estimate=pl.CostEstimate(
            flops=2 * B * C * C * Np + 2 * B * C * Np,
            transcendentals=0,
            bytes_accessed=B * C * C * attn_isize + 2 * B * C * Np * itemsize),
    )(gamma, attention, x_flat)
    return out_flat


# --------------------------------------------------------------------------
# Public wrapper (matches CAM_Module.forward)
# --------------------------------------------------------------------------
def cam_module(x, gamma):
    """x: (B, C, H, W), gamma: (1,)  ->  (B, C, H, W); matches CAM_Module."""
    B, C, H, W = x.shape
    N = H * W
    itemsize = jnp.dtype(x.dtype).itemsize
    cap = _tpu_vmem_capacity_bytes()

    # Lane-align the spatial axis only when N itself is not 128-aligned.
    Np = _round_up(N, 128)
    x_flat = x.reshape(B, C, N)
    if Np != N:
        # TODO(synk): mask the <128 tail columns inside the kernel instead of a
        # host-side pad (would save one x-sized HBM round trip when N % 128 != 0).
        x_flat = jnp.pad(x_flat, ((0, 0), (0, 0), (0, Np - N)))

    gamma = jnp.asarray(gamma, jnp.float32).reshape((1,))

    # Fused-path live-VMEM estimate per batch row: double-buffered x-in and
    # out slabs, one f32 (C, Np) matmul temporary, ~5 (C, C) f32 temporaries.
    per_batch_live = 4 * C * Np * itemsize + C * Np * 4 + 5 * C * C * 4
    fused_budget = int(0.6 * cap)

    if per_batch_live <= fused_budget:
        bt = _largest_divisor_tile(B, per_batch_live, fused_budget)
        vmem_limit = int(min(cap, max(int(1.5 * bt * per_batch_live),
                                      32 * 1024 * 1024)))
        out_flat = pl.pallas_call(
            _cam_fused_kernel,
            out_shape=jax.ShapeDtypeStruct((B, C, Np), x.dtype),
            grid=(B // bt,),
            in_specs=[
                pl.BlockSpec(memory_space=pltpu.MemorySpace.SMEM),    # gamma
                pl.BlockSpec((bt, C, Np), lambda b: (b, 0, 0)),       # x slab
            ],
            out_specs=pl.BlockSpec((bt, C, Np), lambda b: (b, 0, 0)),
            compiler_params=pltpu.CompilerParams(
                dimension_semantics=("parallel",),
                vmem_limit_bytes=vmem_limit),
            cost_estimate=pl.CostEstimate(
                flops=4 * B * C * C * Np,
                transcendentals=B * C * C,
                bytes_accessed=2 * B * C * Np * itemsize),
        )(gamma, x_flat)
    else:
        out_flat = _cam_two_pass(x_flat, gamma, B, C, Np, itemsize, cap)

    if Np != N:
        out_flat = out_flat[:, :, :N]
    return out_flat.reshape(B, C, H, W)


def cam_reference(x, gamma):
    """Pure-JAX reference mirroring the PyTorch forward (f32 math)."""
    B, C, H, W = x.shape
    xf = x.astype(jnp.float32).reshape(B, C, H * W)
    energy = jnp.einsum('bcn,bdn->bcd', xf, xf)
    energy_new = jnp.max(energy, axis=-1, keepdims=True) - energy
    attention = jax.nn.softmax(energy_new, axis=-1)
    out = jnp.einsum('bcd,bdn->bcn', attention, xf).reshape(B, C, H, W)
    return gamma[0] * out + x.astype(jnp.float32)


if __name__ == "__main__":
    key = jax.random.PRNGKey(0)
    B, C, H, W = 2, 4, 16, 16
    # Modest magnitudes keep the channel-Gram energies small so reduced-precision
    # f32 MXU passes stay well inside the comparison tolerance.
    x = 0.1 * jax.random.normal(key, (B, C, H, W), dtype=jnp.float32)

    # Parameter init exactly as in the PyTorch module: gamma = zeros(1).
    gamma0 = jnp.zeros((1,), dtype=jnp.float32)
    out0 = cam_module(x, gamma0)
    jax.block_until_ready(out0)
    assert out0.shape == (B, C, H, W)
    # With gamma == 0 the module is exactly the identity.
    assert jnp.allclose(out0, x, atol=1e-5)

    # Nonzero gamma exercises the attention path.
    gamma_nz = jnp.array([0.5], dtype=jnp.float32)
    out_nz = cam_module(x, gamma_nz)
    ref_nz = cam_reference(x, gamma_nz)
    jax.block_until_ready(out_nz)
    assert jnp.allclose(out_nz, ref_nz, atol=1e-2, rtol=1e-2)

    # Lane-misaligned spatial size (N = 100) exercises the 128-pad path.
    x2 = 0.1 * jax.random.normal(jax.random.PRNGKey(1), (1, 8, 10, 10),
                                 dtype=jnp.float32)
    out2 = cam_module(x2, gamma_nz)
    ref2 = cam_reference(x2, gamma_nz)
    jax.block_until_ready(out2)
    assert jnp.allclose(out2, ref2, atol=1e-2, rtol=1e-2)

    # bf16 input: attention is computed/stored in bf16 (looser tolerance).
    x3 = (0.1 * jax.random.normal(jax.random.PRNGKey(2), (2, 8, 16, 16),
                                  dtype=jnp.float32)).astype(jnp.bfloat16)
    out3 = cam_module(x3, gamma_nz)
    ref3 = cam_reference(x3, gamma_nz)
    jax.block_until_ready(out3)
    assert jnp.allclose(out3.astype(jnp.float32), ref3, atol=5e-2, rtol=5e-2)

    print("KERNEL_OK")
</pallas_src>

<mosaic_0001>
module attributes {stable_mosaic.version = 11 : i64} {
  func.func @_cam_fused_kernel(%arg0: i32, %arg1: memref<1xf32, #tpu.memory_space<smem>>, %arg2: memref<2x4x256xf32, #tpu.memory_space<vmem>>, %arg3: memref<2x4x256xf32, #tpu.memory_space<vmem>>) attributes {dimension_semantics = [#tpu.dimension_semantics<parallel>], iteration_bounds = array<i64: 1>, scalar_prefetch = 0 : i64, scratch_operands = 0 : i64, tpu.core_type = #tpu.core_type<tc>, window_params = [{transform_indices = @transform_0, window_bounds = array<i64: 1>}, {transform_indices = @transform_1, window_bounds = array<i64: 2, 4, 256>}, {transform_indices = @transform_2, window_bounds = array<i64: 2, 4, 256>}]} {
    %c0 = arith.constant 0 : index
    %c0_0 = arith.constant 0 : index
    %c0_1 = arith.constant 0 : index
    %0 = vector.load %arg2[%c0, %c0_0, %c0_1] : memref<2x4x256xf32, #tpu.memory_space<vmem>>, vector<2x4x256xf32>
    "tpu.trace_start"() <{level = 10 : i32, message = "bcn,bdn->bcd"}> : () -> ()
    %cst = arith.constant dense<0.000000e+00> : vector<2x4x4xf32>
    %1 = tpu.matmul %0, %0, %cst {dimension_numbers = #tpu.dot_dimension_numbers<[2], [2], [1], [1], [0, 0, 0, 1, 1, 1], [0], [0]>} : vector<2x4x256xf32>, vector<2x4x256xf32>, vector<2x4x4xf32> -> vector<2x4x4xf32>
    "tpu.trace_stop"() : () -> ()
    %cst_2 = arith.constant dense<0x7F800000> : vector<2x4xf32>
    %2 = vector.multi_reduction <minimumf>, %1, %cst_2 [2] : vector<2x4x4xf32> to vector<2x4xf32>
    %3 = vector.shape_cast %2 : vector<2x4xf32> to vector<2x4x1xf32>
    %4 = vector.broadcast %3 : vector<2x4x1xf32> to vector<2x4x4xf32>
    %5 = arith.subf %4, %1 : vector<2x4x4xf32>
    %6 = math.exp %5 : vector<2x4x4xf32>
    %cst_3 = arith.constant dense<0.000000e+00> : vector<2x4xf32>
    %7 = vector.multi_reduction <add>, %6, %cst_3 [2] : vector<2x4x4xf32> to vector<2x4xf32>
    %8 = vector.shape_cast %7 : vector<2x4xf32> to vector<2x4x1xf32>
    %9 = tpu.reciprocal %8 {approx = true} : vector<2x4x1xf32> -> vector<2x4x1xf32>
    %10 = arith.mulf %8, %9 : vector<2x4x1xf32>
    %cst_4 = arith.constant 2.000000e+00 : f32
    %11 = vector.broadcast %cst_4 : f32 to vector<2x4x1xf32>
    %12 = arith.subf %11, %10 : vector<2x4x1xf32>
    %13 = arith.mulf %9, %12 : vector<2x4x1xf32>
    %14 = vector.broadcast %13 : vector<2x4x1xf32> to vector<2x4x4xf32>
    %15 = arith.mulf %6, %14 : vector<2x4x4xf32>
    "tpu.trace_start"() <{level = 10 : i32, message = "bcd,bdn->bcn"}> : () -> ()
    %cst_5 = arith.constant dense<0.000000e+00> : vector<2x4x256xf32>
    %16 = tpu.matmul %15, %0, %cst_5 {dimension_numbers = #tpu.dot_dimension_numbers<[2], [1], [1], [2], [0, 0, 0, 1, 1, 2], [0], [0]>} : vector<2x4x4xf32>, vector<2x4x256xf32>, vector<2x4x256xf32> -> vector<2x4x256xf32>
    "tpu.trace_stop"() : () -> ()
    %c0_6 = arith.constant 0 : index
    %17 = memref.load %arg1[%c0_6] : memref<1xf32, #tpu.memory_space<smem>>
    %18 = vector.broadcast %17 : f32 to vector<2x4x256xf32>
    %19 = arith.mulf %18, %16 : vector<2x4x256xf32>
    %20 = arith.addf %19, %0 : vector<2x4x256xf32>
    %c0_7 = arith.constant 0 : index
    %c0_8 = arith.constant 0 : index
    %c0_9 = arith.constant 0 : index
    %21 = vector.load %arg3[%c0_7, %c0_8, %c0_9] : memref<2x4x256xf32, #tpu.memory_space<vmem>>, vector<2x4x256xf32>
    tpu.vector_store %arg3[%c0_7, %c0_8, %c0_9], %20 {strides = array<i32>} : memref<2x4x256xf32, #tpu.memory_space<vmem>>, vector<2x4x256xf32>,
    return
  }
  func.func @transform_0(%arg0: i32) -> i32 {
    %c0_i32 = arith.constant 0 : i32
    %c0_i32_0 = arith.constant 0 : i32
    return %c0_i32 : i32
  }
  func.func @transform_1(%arg0: i32) -> (i32, i32, i32) {
    %c0_i32 = arith.constant 0 : i32
    %c0_i32_0 = arith.constant 0 : i32
    %c0_i32_1 = arith.constant 0 : i32
    return %arg0, %c0_i32, %c0_i32_0 : i32, i32, i32
  }
  func.func @transform_2(%arg0: i32) -> (i32, i32, i32) {
    %c0_i32 = arith.constant 0 : i32
    %c0_i32_0 = arith.constant 0 : i32
    %c0_i32_1 = arith.constant 0 : i32
    return %arg0, %c0_i32, %c0_i32_0 : i32, i32, i32
  }
}

</mosaic_0001>

<llo_original>
// kernel: tpu_custom_call.1
$region0: #{tpu_custom_call.1}
  #allocation0 [shape = 'u32[]', space=smem, size = 0x4, offset = 0x4, fixed_abs, tag = 'smem constant byte address 0x4 - core index']
  #allocation1 [shape = 'u32[144,128]{1,0:T(1,128)}', space=vmem, size = 0x12000, scoped, tag = 'internal scratch']
  #allocation2 [shape = 'f32[1]{0:T(128)S(6)}', space=smem, size = 0x200, scoped, tag = 'scoped memory for tpu_custom_call.1']
  %s0 = inlined_call_operand.<no memory space> [shape: f32[1], index: 0, kind: input, shape index: {}]
  %s1 = inlined_call_operand.hbm [shape: f32[2,4,256], index: 1, kind: input, shape index: {}]
  %s2 = inlined_call_operand.hbm [shape: f32[2,4,256], index: 2, kind: output, shape index: {}]
  %s3 = sld [smem:[#allocation0]]
  $region22: #{tpu_custom_call.1} parent=0
    _
  %s5 = ssub.s32 1, %s3
  %s6 = scalar_select 0, %s5, %s3
  %7 = sst [smem:[#allocation2]] %s0
  $region1: #{tpu_custom_call.1} parent=0
    #allocation3 [shape = 'u8[8192]{0}', space=vmem, size = 0x2000, scoped, tag = 'input window, operand 1, single buffered']
    #allocation4 [shape = 's32[1]{0}', space=sflag, size = 0x4, scoped, tag = 'scoped memory for tpu_custom_call.1']
    #allocation5 [shape = 's32[1]{0}', space=sflag, size = 0x4, scoped, tag = 'scoped memory for tpu_custom_call.1']
    #allocation6 [shape = 'u8[8192]{0}', space=vmem, size = 0x2000, scoped, tag = 'output window, operand 0, single buffered']
    %8 = vsyncpa [#allocation4], 0
    %9 = vsyncpa [#allocation5], 0
    // Predicated region
    $region2: #{tpu_custom_call.1} parent=1 // pred_check
      _
    $region3: #{tpu_custom_call.1} parent=1 // pred_check_branch
      %11 = sbr.rel (0) target = $region5
    $region4: #{tpu_custom_call.1} parent=1 // pred_region
      _
    $region5: #{tpu_custom_call.1} parent=1 // pred_fallthru
      _
    // Predicated region
    $region6: #{tpu_custom_call.1} parent=1 // pred_check
      _
    $region7: #{tpu_custom_call.1} parent=1 // pred_check_branch
      %13 = sbr.rel (0) target = $region9
    $region8: #{tpu_custom_call.1} parent=1 // pred_region
      %s15 = ssub.s32 256, 256
      %16 = vsyncadd [#allocation4], %s15
      %s17 = sshll.u32 [#allocation3], 4
      %s18 = int_to_ptr.vmem [resolvable:$true] %s17
      %23 = dma.hbm_to_vmem [thread:$0]  %s1, 256, %s18, [#allocation4], 128, 128, 8
    $region9: #{tpu_custom_call.1} parent=1 // pred_fallthru
      _
    // Predicated region
    $region10: #{tpu_custom_call.1} parent=1 // pred_check
      _
    $region11: #{tpu_custom_call.1} parent=1 // pred_check_branch
      %25 = sbr.rel (0) target = $region13
    $region12: #{tpu_custom_call.1} parent=1 // pred_region
      %26 = dma.done [#allocation4], 256
    $region13: #{tpu_custom_call.1} parent=1 // pred_fallthru
      _
    %v27 = vld [vmem:[#allocation3] sm:$0xff]
    %v28 = vld [vmem:[#allocation3 + $0x8] sm:$0xff]
    %v30 = vcombine.high %v27, %v27
    %32 = vmatprep.subr.mxu0 %v30
    %33 = vmatpush1.xpose.msra.mxu0 %v27
    %34 = vmatprep.subr.mxu0 0.0
    %35 = vmatpush1.xpose.msra.mxu0 0.0
    %36 = vmatprep.subr.mxu0 0.0
    %37 = vmatpush1.xpose.msra.mxu0 0.0
    %38 = vmatprep.subr.mxu0 0.0
    %39 = vmatpush1.xpose.msra.mxu0 0.0
    %40 = vmatprep.subr.mxu0 0.0
    %41 = vmatpush1.xpose.msra.mxu0 0.0
    %42 = vmatprep.subr.mxu0 0.0
    %43 = vmatpush1.xpose.msra.mxu0 0.0
    %44 = vmatprep.subr.mxu0 0.0
    %45 = vmatpush1.xpose.msra.mxu0 0.0
    %46 = vmatprep.subr.mxu0 0.0
    %47 = vmatpush1.xpose.msra.mxu0 0.0
    %48 = vmatprep.subr.mxu0 0.0
    %49 = vmatpush1.xpose.msra.mxu0 0.0
    %50 = vmatprep.subr.mxu0 0.0
    %51 = vmatpush1.xpose.msra.mxu0 0.0
    %52 = vmatprep.subr.mxu0 0.0
    %53 = vmatpush1.xpose.msra.mxu0 0.0
    %54 = vmatprep.subr.mxu0 0.0
    %55 = vmatpush1.xpose.msra.mxu0 0.0
    %56 = vmatprep.subr.mxu0 0.0
    %57 = vmatpush1.xpose.msra.mxu0 0.0
    %58 = vmatprep.subr.mxu0 0.0
    %59 = vmatpush1.xpose.msra.mxu0 0.0
    %60 = vmatprep.subr.mxu0 0.0
    %61 = vmatpush1.xpose.msra.mxu0 0.0
    %62 = vmatprep.subr.mxu0 0.0
    %63 = vmatpush1.xpose.msra.mxu0 0.0
    %64 = vmatprep.subr.mxu0 0.0
    %65 = vmatpush1.xpose.msra.mxu0 0.0
    %66 = vmatprep.subr.mxu0 0.0
    %67 = vmatpush1.xpose.msra.mxu0 0.0
    %68 = vmatprep.subr.mxu0 0.0
    %69 = vmatpush1.xpose.msra.mxu0 0.0
    %70 = vmatprep.subr.mxu0 0.0
    %71 = vmatpush1.xpose.msra.mxu0 0.0
    %72 = vmatprep.subr.mxu0 0.0
    %73 = vmatpush1.xpose.msra.mxu0 0.0
    %74 = vmatprep.subr.mxu0 0.0
    %75 = vmatpush1.xpose.msra.mxu0 0.0
    %76 = vmatprep.subr.mxu0 0.0
    %77 = vmatpush1.xpose.msra.mxu0 0.0
    %78 = vmatprep.subr.mxu0 0.0
    %79 = vmatpush1.xpose.msra.mxu0 0.0
    %80 = vmatprep.subr.mxu0 0.0
    %81 = vmatpush1.xpose.msra.mxu0 0.0
    %82 = vmatprep.subr.mxu0 0.0
    %83 = vmatpush1.xpose.msra.mxu0 0.0
    %84 = vmatprep.subr.mxu0 0.0
    %85 = vmatpush1.xpose.msra.mxu0 0.0
    %86 = vmatprep.subr.mxu0 0.0
    %87 = vmatpush1.xpose.msra.mxu0 0.0
    %88 = vmatprep.subr.mxu0 0.0
    %89 = vmatpush1.xpose.msra.mxu0 0.0
    %90 = vmatprep.subr.mxu0 0.0
    %91 = vmatpush1.xpose.msra.mxu0 0.0
    %92 = vmatprep.subr.mxu0 0.0
    %93 = vmatpush1.xpose.msra.mxu0 0.0
    %94 = vmatprep.subr.mxu0 0.0
    %95 = vmatpush1.xpose.msra.mxu0 0.0
    %96 = vmatprep.mubr.f32.mxu0 %v30
    %97 = vmatmul.mubr.f32.gmra.mrb[0].mxu0 %v27
    %v98 = vpop.f32.mrb[0].mxu0
    %v99 = vadd.f32 0.0, %v98
    %v100 = vpop.f32.mrb[0].mxu0
    %101 = vdwg.mxu0
    %v103 = vcombine.high %v28, %v28
    %105 = vmatprep.subr.mxu0 %v103
    %106 = vmatpush1.xpose.msra.mxu0 %v28
    %107 = vmatprep.subr.mxu0 0.0
    %108 = vmatpush1.xpose.msra.mxu0 0.0
    %109 = vmatprep.subr.mxu0 0.0
    %110 = vmatpush1.xpose.msra.mxu0 0.0
    %111 = vmatprep.subr.mxu0 0.0
    %112 = vmatpush1.xpose.msra.mxu0 0.0
    %113 = vmatprep.subr.mxu0 0.0
    %114 = vmatpush1.xpose.msra.mxu0 0.0
    %115 = vmatprep.subr.mxu0 0.0
    %116 = vmatpush1.xpose.msra.mxu0 0.0
    %117 = vmatprep.subr.mxu0 0.0
    %118 = vmatpush1.xpose.msra.mxu0 0.0
    %119 = vmatprep.subr.mxu0 0.0
    %120 = vmatpush1.xpose.msra.mxu0 0.0
    %121 = vmatprep.subr.mxu0 0.0
    %122 = vmatpush1.xpose.msra.mxu0 0.0
    %123 = vmatprep.subr.mxu0 0.0
    %124 = vmatpush1.xpose.msra.mxu0 0.0
    %125 = vmatprep.subr.mxu0 0.0
    %126 = vmatpush1.xpose.msra.mxu0 0.0
    %127 = vmatprep.subr.mxu0 0.0
    %128 = vmatpush1.xpose.msra.mxu0 0.0
    %129 = vmatprep.subr.mxu0 0.0
    %130 = vmatpush1.xpose.msra.mxu0 0.0
    %131 = vmatprep.subr.mxu0 0.0
    %132 = vmatpush1.xpose.msra.mxu0 0.0
    %133 = vmatprep.subr.mxu0 0.0
    %134 = vmatpush1.xpose.msra.mxu0 0.0
    %135 = vmatprep.subr.mxu0 0.0
    %136 = vmatpush1.xpose.msra.mxu0 0.0
    %137 = vmatprep.subr.mxu0 0.0
    %138 = vmatpush1.xpose.msra.mxu0 0.0
    %139 = vmatprep.subr.mxu0 0.0
    %140 = vmatpush1.xpose.msra.mxu0 0.0
    %141 = vmatprep.subr.mxu0 0.0
    %142 = vmatpush1.xpose.msra.mxu0 0.0
    %143 = vmatprep.subr.mxu0 0.0
    %144 = vmatpush1.xpose.msra.mxu0 0.0
    %145 = vmatprep.subr.mxu0 0.0
    %146 = vmatpush1.xpose.msra.mxu0 0.0
    %147 = vmatprep.subr.mxu0 0.0
    %148 = vmatpush1.xpose.msra.mxu0 0.0
    %149 = vmatprep.subr.mxu0 0.0
    %150 = vmatpush1.xpose.msra.mxu0 0.0
    %151 = vmatprep.subr.mxu0 0.0
    %152 = vmatpush1.xpose.msra.mxu0 0.0
    %153 = vmatprep.subr.mxu0 0.0
    %154 = vmatpush1.xpose.msra.mxu0 0.0
    %155 = vmatprep.subr.mxu0 0.0
    %156 = vmatpush1.xpose.msra.mxu0 0.0
    %157 = vmatprep.subr.mxu0 0.0
    %158 = vmatpush1.xpose.msra.mxu0 0.0
    %159 = vmatprep.subr.mxu0 0.0
    %160 = vmatpush1.xpose.msra.mxu0 0.0
    %161 = vmatprep.subr.mxu0 0.0
    %162 = vmatpush1.xpose.msra.mxu0 0.0
    %163 = vmatprep.subr.mxu0 0.0
    %164 = vmatpush1.xpose.msra.mxu0 0.0
    %165 = vmatprep.subr.mxu0 0.0
    %166 = vmatpush1.xpose.msra.mxu0 0.0
    %167 = vmatprep.subr.mxu0 0.0
    %168 = vmatpush1.xpose.msra.mxu0 0.0
    %169 = vmatprep.mubr.f32.mxu0 %v103
    %170 = vmatmul.mubr.f32.gmra.mrb[0].mxu0 %v28
    %v171 = vpop.f32.mrb[0].mxu0
    %v172 = vadd.f32 0.0, %v171
    %v173 = vpop.f32.mrb[0].mxu0
    %174 = vdwg.mxu0
    %vm175 = vcmask 27648
    %v176 = vsel %vm175, %v99, inf
    %177 = vmin.xlane.f32.xlu0 %v176
    %v178 = vpop.xlane.xlu0 %177
    %v179 = vsel %vm175, %v172, inf
    %180 = vmin.xlane.f32.xlu0 %v179
    %v181 = vpop.xlane.xlu0 %180
    %v182 = vsub.f32 %v178, %v99
    %v183 = vsub.f32 %v181, %v172
    %v184 = vmul.f32 %v182, 1.442695
    %v185 = vpow.pop %v184
    %v186 = vmul.f32 %v183, 1.442695
    %v187 = vpow.pop %v186
    %v188 = vsel %vm175, %v185, 0.0
    %189 = vadd.xlane.f32.xlu0 %v188
    %v190 = vpop.xlane.xlu0 %189
    %v191 = vsel %vm175, %v187, 0.0
    %192 = vadd.xlane.f32.xlu0 %v191
    %v193 = vpop.xlane.xlu0 %192
    %v194 = vrcp.pop %v190
    %v195 = vrcp.pop %v193
    %v196 = vmul.f32 %v190, %v194
    %v197 = vmul.f32 %v193, %v195
    %v198 = vsub.f32 2.0, %v196
    %v199 = vsub.f32 2.0, %v197
    %v200 = vmul.f32 %v194, %v198
    %v201 = vmul.f32 %v195, %v199
    %v202 = vmul.f32 %v185, %v200
    %v203 = vmul.f32 %v187, %v201
    %vm204 = vcmask 31744
    %v206 = vsel %vm204, %v202, 0
    %vm208 = vcmask 1043456
    %v209 = vsel %vm208, %v27, 0
    %v211 = vsel %vm208, %v30, 0
    %213 = vmatprep.subr.mxu0 %v211
    %214 = vmatpush1.msra.mxu0 %v209
    %215 = vmatprep.subr.mxu0 0.0
    %216 = vmatpush1.msra.mxu0 0.0
    %217 = vmatprep.subr.mxu0 0.0
    %218 = vmatpush1.msra.mxu0 0.0
    %219 = vmatprep.subr.mxu0 0.0
    %220 = vmatpush1.msra.mxu0 0.0
    %221 = vmatprep.subr.mxu0 0.0
    %222 = vmatpush1.msra.mxu0 0.0
    %223 = vmatprep.subr.mxu0 0.0
    %224 = vmatpush1.msra.mxu0 0.0
    %225 = vmatprep.subr.mxu0 0.0
    %226 = vmatpush1.msra.mxu0 0.0
    %227 = vmatprep.subr.mxu0 0.0
    %228 = vmatpush1.msra.mxu0 0.0
    %229 = vmatprep.subr.mxu0 0.0
    %230 = vmatpush1.msra.mxu0 0.0
    %231 = vmatprep.subr.mxu0 0.0
    %232 = vmatpush1.msra.mxu0 0.0
    %233 = vmatprep.subr.mxu0 0.0
    %234 = vmatpush1.msra.mxu0 0.0
    %235 = vmatprep.subr.mxu0 0.0
    %236 = vmatpush1.msra.mxu0 0.0
    %237 = vmatprep.subr.mxu0 0.0
    %238 = vmatpush1.msra.mxu0 0.0
    %239 = vmatprep.subr.mxu0 0.0
    %240 = vmatpush1.msra.mxu0 0.0
    %241 = vmatprep.subr.mxu0 0.0
    %242 = vmatpush1.msra.mxu0 0.0
    %243 = vmatprep.subr.mxu0 0.0
    %244 = vmatpush1.msra.mxu0 0.0
    %245 = vmatprep.subr.mxu0 0.0
    %246 = vmatpush1.msra.mxu0 0.0
    %247 = vmatprep.subr.mxu0 0.0
    %248 = vmatpush1.msra.mxu0 0.0
    %249 = vmatprep.subr.mxu0 0.0
    %250 = vmatpush1.msra.mxu0 0.0
    %251 = vmatprep.subr.mxu0 0.0
    %252 = vmatpush1.msra.mxu0 0.0
    %253 = vmatprep.subr.mxu0 0.0
    %254 = vmatpush1.msra.mxu0 0.0
    %255 = vmatprep.subr.mxu0 0.0
    %256 = vmatpush1.msra.mxu0 0.0
    %257 = vmatprep.subr.mxu0 0.0
    %258 = vmatpush1.msra.mxu0 0.0
    %259 = vmatprep.subr.mxu0 0.0
    %260 = vmatpush1.msra.mxu0 0.0
    %261 = vmatprep.subr.mxu0 0.0
    %262 = vmatpush1.msra.mxu0 0.0
    %263 = vmatprep.subr.mxu0 0.0
    %264 = vmatpush1.msra.mxu0 0.0
    %265 = vmatprep.subr.mxu0 0.0
    %266 = vmatpush1.msra.mxu0 0.0
    %267 = vmatprep.subr.mxu0 0.0
    %268 = vmatpush1.msra.mxu0 0.0
    %269 = vmatprep.subr.mxu0 0.0
    %270 = vmatpush1.msra.mxu0 0.0
    %271 = vmatprep.subr.mxu0 0.0
    %272 = vmatpush1.msra.mxu0 0.0
    %273 = vmatprep.subr.mxu0 0.0
    %274 = vmatpush1.msra.mxu0 0.0
    %275 = vmatprep.subr.mxu0 0.0
    %276 = vmatpush1.msra.mxu0 0.0
    %277 = vmatprep.mubr.f32.mxu0 0.0
    %278 = vmatmul.mubr.f32.gmra.mrb[0].mxu0 %v206
    %v279 = vpop.f32.mrb[0].mxu0
    %v280 = vadd.f32 0.0, %v279
    %v281 = vpop.f32.mrb[0].mxu0
    %v282 = vadd.f32 0.0, %v281
    %283 = vdwg.mxu0
    %v285 = vsel %vm204, %v203, 0
    %v287 = vsel %vm208, %v28, 0
    %v289 = vsel %vm208, %v103, 0
    %291 = vmatprep.subr.mxu0 %v289
    %292 = vmatpush1.msra.mxu0 %v287
    %293 = vmatprep.subr.mxu0 0.0
    %294 = vmatpush1.msra.mxu0 0.0
    %295 = vmatprep.subr.mxu0 0.0
    %296 = vmatpush1.msra.mxu0 0.0
    %297 = vmatprep.subr.mxu0 0.0
    %298 = vmatpush1.msra.mxu0 0.0
    %299 = vmatprep.subr.mxu0 0.0
    %300 = vmatpush1.msra.mxu0 0.0
    %301 = vmatprep.subr.mxu0 0.0
    %302 = vmatpush1.msra.mxu0 0.0
    %303 = vmatprep.subr.mxu0 0.0
    %304 = vmatpush1.msra.mxu0 0.0
    %305 = vmatprep.subr.mxu0 0.0
    %306 = vmatpush1.msra.mxu0 0.0
    %307 = vmatprep.subr.mxu0 0.0
    %308 = vmatpush1.msra.mxu0 0.0
    %309 = vmatprep.subr.mxu0 0.0
    %310 = vmatpush1.msra.mxu0 0.0
    %311 = vmatprep.subr.mxu0 0.0
    %312 = vmatpush1.msra.mxu0 0.0
    %313 = vmatprep.subr.mxu0 0.0
    %314 = vmatpush1.msra.mxu0 0.0
    %315 = vmatprep.subr.mxu0 0.0
    %316 = vmatpush1.msra.mxu0 0.0
    %317 = vmatprep.subr.mxu0 0.0
    %318 = vmatpush1.msra.mxu0 0.0
    %319 = vmatprep.subr.mxu0 0.0
    %320 = vmatpush1.msra.mxu0 0.0
    %321 = vmatprep.subr.mxu0 0.0
    %322 = vmatpush1.msra.mxu0 0.0
    %323 = vmatprep.subr.mxu0 0.0
    %324 = vmatpush1.msra.mxu0 0.0
    %325 = vmatprep.subr.mxu0 0.0
    %326 = vmatpush1.msra.mxu0 0.0
    %327 = vmatprep.subr.mxu0 0.0
    %328 = vmatpush1.msra.mxu0 0.0
    %329 = vmatprep.subr.mxu0 0.0
    %330 = vmatpush1.msra.mxu0 0.0
    %331 = vmatprep.subr.mxu0 0.0
    %332 = vmatpush1.msra.mxu0 0.0
    %333 = vmatprep.subr.mxu0 0.0
    %334 = vmatpush1.msra.mxu0 0.0
    %335 = vmatprep.subr.mxu0 0.0
    %336 = vmatpush1.msra.mxu0 0.0
    %337 = vmatprep.subr.mxu0 0.0
    %338 = vmatpush1.msra.mxu0 0.0
    %339 = vmatprep.subr.mxu0 0.0
    %340 = vmatpush1.msra.mxu0 0.0
    %341 = vmatprep.subr.mxu0 0.0
    %342 = vmatpush1.msra.mxu0 0.0
    %343 = vmatprep.subr.mxu0 0.0
    %344 = vmatpush1.msra.mxu0 0.0
    %345 = vmatprep.subr.mxu0 0.0
    %346 = vmatpush1.msra.mxu0 0.0
    %347 = vmatprep.subr.mxu0 0.0
    %348 = vmatpush1.msra.mxu0 0.0
    %349 = vmatprep.subr.mxu0 0.0
    %350 = vmatpush1.msra.mxu0 0.0
    %351 = vmatprep.subr.mxu0 0.0
    %352 = vmatpush1.msra.mxu0 0.0
    %353 = vmatprep.subr.mxu0 0.0
    %354 = vmatpush1.msra.mxu0 0.0
    %355 = vmatprep.mubr.f32.mxu0 0.0
    %356 = vmatmul.mubr.f32.gmra.mrb[0].mxu0 %v285
    %v357 = vpop.f32.mrb[0].mxu0
    %v358 = vadd.f32 0.0, %v357
    %v359 = vpop.f32.mrb[0].mxu0
    %v360 = vadd.f32 0.0, %v359
    %361 = vdwg.mxu0
    %s362 = sld [smem:[#allocation2]]
    %v363 = vstv %s362
    %v364 = vmul.f32 %v363, %v280
    %v365 = vmul.f32 %v363, %v282
    %v366 = vmul.f32 %v363, %v358
    %v367 = vmul.f32 %v363, %v360
    %v368 = vadd.f32 %v364, %v27
    %v369 = vadd.f32 %v365, %v30
    %v370 = vadd.f32 %v366, %v28
    %v371 = vadd.f32 %v367, %v103
    %v376 = vcombine.low %v368, %v369
    %v377 = vcombine.low %v370, %v371
    %380 = vst [vmem:[#allocation6] sm:$0xff] %v376
    %381 = vst [vmem:[#allocation6 + $0x8] sm:$0xff] %v377
    // Predicated region
    $region14: #{tpu_custom_call.1} parent=1 // pred_check
      _
    $region15: #{tpu_custom_call.1} parent=1 // pred_check_branch
      %383 = sbr.rel (0) target = $region17
    $region16: #{tpu_custom_call.1} parent=1 // pred_region
      %s385 = ssub.s32 256, 256
      %386 = vsyncadd [#allocation5], %s385
      %s387 = sshll.u32 [#allocation6], 4
      %s388 = int_to_ptr.vmem [resolvable:$true] %s387
      %393 = dma.vmem_to_hbm [thread:$0]  %s388, 256, %s2, [#allocation5], 128, 128, 8
    $region17: #{tpu_custom_call.1} parent=1 // pred_fallthru
      _
    // Predicated region
    $region18: #{tpu_custom_call.1} parent=1 // pred_check
      _
    $region19: #{tpu_custom_call.1} parent=1 // pred_check_branch
      %395 = sbr.rel (0) target = $region21
    $region20: #{tpu_custom_call.1} parent=1 // pred_region
      %396 = dma.done [#allocation5], 256
    $region21: #{tpu_custom_call.1} parent=1 // pred_fallthru
      _
    %397 = vsyncpa [#allocation4], 1
    %398 = vsyncpa [#allocation5], 1

</llo_original>
